<compile_context>
chip_gen: v6e
topology: v6e:2x2x1
jax: 0.10.0
libtpu: 0.0.40
codegen_flags: <defaults>
</compile_context>

<pallas_src>
import functools

import jax
import jax.numpy as jnp
from jax.experimental import pallas as pl
from jax.experimental.pallas import tpu as pltpu

LANE = 128
BATCH_ALIGN = 16          # bf16 sublane packing for activation tiles


def _round_up(x, m):
    return ((x + m - 1) // m) * m


def _actor_kernel(obs_ref, w0_ref, w1_ref, w2_ref, b_ref, out_ref, *,
                  h0p, h1p, act_dim):
    # obs arrives f32 at its natural feature width; cast to bf16 in-kernel
    # (no wrapper pad/cast pass). bf16 x bf16 -> f32 accumulation on the MXU.
    x = obs_ref[...].astype(jnp.bfloat16)

    # Layer 0: Linear + ReLU
    h = jnp.dot(x, w0_ref[...], preferred_element_type=jnp.float32)
    h = jnp.maximum(h + b_ref[0:1, :h0p], 0.0).astype(jnp.bfloat16)

    # Layer 1: Linear + ReLU
    h = jnp.dot(h, w1_ref[...], preferred_element_type=jnp.float32)
    h = jnp.maximum(h + b_ref[1:2, :h1p], 0.0).astype(jnp.bfloat16)

    # Output layer: Linear + Tanh. Only the first act_dim lanes are real;
    # slice before bias/tanh and store a narrow (tb, act_dim) block.
    h = jnp.dot(h, w2_ref[...], preferred_element_type=jnp.float32)
    y = h[:, :act_dim] + b_ref[2:3, :act_dim]
    out_ref[...] = jnp.tanh(y).astype(out_ref.dtype)


def pack_actor_params(params):
    """params: list of (W (in,out) f32, b (out,) f32), 3 layers.

    Pads hidden/output feature dims to multiples of 128 (lane-dense MXU
    tiles); the first layer's input dim is only padded to the bf16 sublane
    multiple (16) so obs can be streamed at (near-)natural width. Padded
    weight rows/cols and bias lanes are exactly zero, so padded lanes stay
    zero through ReLU and never leak into the real outputs.
    """
    assert len(params) == 3, "Actor kernel is specialized for 2 hidden layers"
    padded_w, padded_dims = [], []
    for j, (w, b) in enumerate(params):
        fin, fout = w.shape
        finp = _round_up(fin, BATCH_ALIGN) if j == 0 else _round_up(fin, LANE)
        foutp = _round_up(fout, LANE)
        wp = jnp.zeros((finp, foutp), jnp.float32).at[:fin, :fout].set(w)
        padded_w.append(wp.astype(jnp.bfloat16))
        padded_dims.append((finp, foutp))

    pmax = max(d[1] for d in padded_dims)
    b_packed = jnp.zeros((len(params), pmax), jnp.float32)
    for j, (_, b) in enumerate(params):
        b_packed = b_packed.at[j, : b.shape[0]].set(b)

    return {
        "w": tuple(padded_w),
        "b": b_packed,
        "dims": tuple(padded_dims),              # static python ints
        "obs_dim": int(params[0][0].shape[0]),
        "act_dim": int(params[-1][0].shape[1]),
    }


def _choose_batch_tiling(batch, *, tile_batch=1024, min_steps=2):
    """Pick (tile_rows, padded_batch).

    - Large batches: aim for tiles up to `tile_batch` rows (per-step overhead
      ~0.35us dominates small tiles) while keeping at least `min_steps` grid
      steps so v7x's two TensorCores both get work via the "parallel" axis.
    - Tile is derived from ceil(batch/steps), so batch padding waste stays
      bounded (no rounding a batch of 1100 up to 2048).
    - Tiny batches: one sublane-aligned tile.
    """
    if batch <= BATCH_ALIGN * min_steps:
        tb = max(BATCH_ALIGN, _round_up(batch, BATCH_ALIGN))
        return tb, tb
    steps = max(min_steps, -(-batch // tile_batch))
    tb = _round_up(-(-batch // steps), BATCH_ALIGN)
    return tb, tb * steps


def actor_forward(obs, packed, *, tile_batch=1024, min_steps=2):
    """obs: (batch, obs_dim) f32. Returns (batch, act_dim) f32 actions."""
    w0, w1, w2 = packed["w"]
    b_packed = packed["b"]
    (fin0p, h0p), (_, h1p), (_, ap) = packed["dims"]
    obs_dim, act_dim = packed["obs_dim"], packed["act_dim"]

    batch = obs.shape[0]
    tb, padded_batch = _choose_batch_tiling(
        batch, tile_batch=tile_batch, min_steps=min_steps)

    # Only touch obs in the wrapper when we truly must (ragged batch rows or
    # an obs_dim that isn't a bf16 sublane multiple). No dtype cast here.
    x = obs
    if padded_batch != batch or fin0p != obs_dim:
        x = jnp.zeros((padded_batch, fin0p), obs.dtype)
        x = x.at[:batch, :obs_dim].set(obs)

    grid = (padded_batch // tb,)
    n_layers, pmax = b_packed.shape

    kernel = functools.partial(_actor_kernel, h0p=h0p, h1p=h1p, act_dim=act_dim)

    flops = 2 * padded_batch * (fin0p * h0p + h0p * h1p + h1p * ap)
    bytes_accessed = (padded_batch * fin0p * 4                 # f32 obs in
                      + padded_batch * act_dim * 4             # narrow f32 out
                      + (w0.size + w1.size + w2.size) * 2      # bf16 weights
                      + b_packed.size * 4)                     # f32 biases

    out = pl.pallas_call(
        kernel,
        out_shape=jax.ShapeDtypeStruct((padded_batch, act_dim), jnp.float32),
        grid=grid,
        in_specs=[
            # obs tile: streamed / double-buffered over the batch grid;
            # last block dim == full array dim (natural feature width).
            pl.BlockSpec((tb, fin0p), lambda i: (i, 0)),
            # weights + packed biases: constant index_map -> resident in VMEM.
            pl.BlockSpec((fin0p, h0p), lambda i: (0, 0)),
            pl.BlockSpec((h0p, h1p), lambda i: (0, 0)),
            pl.BlockSpec((h1p, ap), lambda i: (0, 0)),
            pl.BlockSpec((n_layers, pmax), lambda i: (0, 0)),
        ],
        # Narrow output block: only the real act_dim lanes hit HBM.
        out_specs=pl.BlockSpec((tb, act_dim), lambda i: (i, 0)),
        compiler_params=pltpu.CompilerParams(
            dimension_semantics=("parallel",),   # megacore split on v7x
        ),
        cost_estimate=pl.CostEstimate(
            flops=flops,
            transcendentals=padded_batch * act_dim,
            bytes_accessed=bytes_accessed,
        ),
    )(x, w0, w1, w2, b_packed)

    if padded_batch != batch:
        out = out[:batch]
    return out


# ---------------------------------------------------------------------------
# Parameter init + pure-JAX reference (mirrors the PyTorch module)
# ---------------------------------------------------------------------------

def xavier_uniform(key, fan_in, fan_out):
    # Matches torch.nn.init.xavier_uniform_ (gain=1).
    limit = jnp.sqrt(6.0 / (fan_in + fan_out))
    return jax.random.uniform(key, (fan_in, fan_out), jnp.float32,
                              minval=-limit, maxval=limit)


def make_actor_params(key, obs_dim, hidden_dim, act_dim):
    sizes = [obs_dim] + list(hidden_dim) + [act_dim]
    params = []
    for j in range(len(sizes) - 1):
        key, wk = jax.random.split(key)
        w = xavier_uniform(wk, sizes[j], sizes[j + 1])
        b = jnp.zeros((sizes[j + 1],), jnp.float32)  # Xavier-init zero bias
        params.append((w, b))
    return params


def actor_reference(obs, params):
    h = obs
    for i, (w, b) in enumerate(params):
        h = h @ w + b
        if i < len(params) - 1:
            h = jnp.maximum(h, 0.0)
        else:
            h = jnp.tanh(h)
    return h


if __name__ == "__main__":
    obs_dim, act_dim = 32, 8
    hidden_dim = (64, 64)
    batch = 8

    key = jax.random.PRNGKey(0)
    key, pkey, okey = jax.random.split(key, 3)

    params = make_actor_params(pkey, obs_dim, hidden_dim, act_dim)
    obs = jax.random.normal(okey, (batch, obs_dim), jnp.float32)

    packed = pack_actor_params(params)
    action = actor_forward(obs, packed)
    action = jax.block_until_ready(action)

    # Correctness check against the pure-JAX f32 reference. Tolerance is
    # loosened because the kernel uses bf16 weights/activations (f32 accum).
    ref = actor_reference(obs, params)
    assert action.shape == (batch, act_dim)
    max_err = float(jnp.max(jnp.abs(action - ref)))
    assert jnp.allclose(action, ref, atol=5e-2, rtol=5e-2), max_err

    print("KERNEL_OK")
</pallas_src>

<mosaic_0001>
module attributes {stable_mosaic.version = 11 : i64} {
  func.func @_actor_kernel(%arg0: i32, %arg1: memref<16x32xf32, #tpu.memory_space<vmem>>, %arg2: memref<32x128xbf16, #tpu.memory_space<vmem>>, %arg3: memref<128x128xbf16, #tpu.memory_space<vmem>>, %arg4: memref<128x128xbf16, #tpu.memory_space<vmem>>, %arg5: memref<3x128xf32, #tpu.memory_space<vmem>>, %arg6: memref<16x8xf32, #tpu.memory_space<vmem>>) attributes {dimension_semantics = [#tpu.dimension_semantics<parallel>], iteration_bounds = array<i64: 1>, scalar_prefetch = 0 : i64, scratch_operands = 0 : i64, tpu.core_type = #tpu.core_type<tc>, window_params = [{transform_indices = @transform_0, window_bounds = array<i64: 16, 32>}, {pipeline_mode = #tpu.pipeline_mode<synchronous>, transform_indices = @transform_1, window_bounds = array<i64: 32, 128>}, {pipeline_mode = #tpu.pipeline_mode<synchronous>, transform_indices = @transform_2, window_bounds = array<i64: 128, 128>}, {pipeline_mode = #tpu.pipeline_mode<synchronous>, transform_indices = @transform_3, window_bounds = array<i64: 128, 128>}, {pipeline_mode = #tpu.pipeline_mode<synchronous>, transform_indices = @transform_4, window_bounds = array<i64: 3, 128>}, {transform_indices = @transform_5, window_bounds = array<i64: 16, 8>}]} {
    %c0 = arith.constant 0 : index
    %c0_0 = arith.constant 0 : index
    %0 = vector.load %arg1[%c0, %c0_0] : memref<16x32xf32, #tpu.memory_space<vmem>>, vector<16x32xf32>
    %1 = arith.truncf %0 : vector<16x32xf32> to vector<16x32xbf16>
    %c0_1 = arith.constant 0 : index
    %c0_2 = arith.constant 0 : index
    %2 = vector.load %arg2[%c0_1, %c0_2] : memref<32x128xbf16, #tpu.memory_space<vmem>>, vector<32x128xbf16>
    %cst = arith.constant dense<0.000000e+00> : vector<16x128xf32>
    %3 = tpu.matmul %1, %2, %cst {dimension_numbers = #tpu.dot_dimension_numbers<[1], [0], [0], [1], [0, 0, 1, 1], [], []>} : vector<16x32xbf16>, vector<32x128xbf16>, vector<16x128xf32> -> vector<16x128xf32>
    %c0_3 = arith.constant 0 : index
    %c0_4 = arith.constant 0 : index
    %4 = vector.load %arg5[%c0_3, %c0_4] : memref<3x128xf32, #tpu.memory_space<vmem>>, vector<1x128xf32>
    %5 = vector.broadcast %4 : vector<1x128xf32> to vector<16x128xf32>
    %6 = arith.addf %3, %5 : vector<16x128xf32>
    %cst_5 = arith.constant 0.000000e+00 : f32
    %7 = vector.broadcast %cst_5 : f32 to vector<16x128xf32>
    %8 = arith.maximumf %6, %7 : vector<16x128xf32>
    %9 = arith.truncf %8 : vector<16x128xf32> to vector<16x128xbf16>
    %c0_6 = arith.constant 0 : index
    %c0_7 = arith.constant 0 : index
    %10 = vector.load %arg3[%c0_6, %c0_7] : memref<128x128xbf16, #tpu.memory_space<vmem>>, vector<128x128xbf16>
    %cst_8 = arith.constant dense<0.000000e+00> : vector<16x128xf32>
    %11 = tpu.matmul %9, %10, %cst_8 {dimension_numbers = #tpu.dot_dimension_numbers<[1], [0], [0], [1], [0, 0, 1, 1], [], []>} : vector<16x128xbf16>, vector<128x128xbf16>, vector<16x128xf32> -> vector<16x128xf32>
    %c1 = arith.constant 1 : index
    %c0_9 = arith.constant 0 : index
    %12 = vector.load %arg5[%c1, %c0_9] : memref<3x128xf32, #tpu.memory_space<vmem>>, vector<1x128xf32>
    %13 = vector.broadcast %12 : vector<1x128xf32> to vector<16x128xf32>
    %14 = arith.addf %11, %13 : vector<16x128xf32>
    %cst_10 = arith.constant 0.000000e+00 : f32
    %15 = vector.broadcast %cst_10 : f32 to vector<16x128xf32>
    %16 = arith.maximumf %14, %15 : vector<16x128xf32>
    %17 = arith.truncf %16 : vector<16x128xf32> to vector<16x128xbf16>
    %c0_11 = arith.constant 0 : index
    %c0_12 = arith.constant 0 : index
    %18 = vector.load %arg4[%c0_11, %c0_12] : memref<128x128xbf16, #tpu.memory_space<vmem>>, vector<128x128xbf16>
    %cst_13 = arith.constant dense<0.000000e+00> : vector<16x128xf32>
    %19 = tpu.matmul %17, %18, %cst_13 {dimension_numbers = #tpu.dot_dimension_numbers<[1], [0], [0], [1], [0, 0, 1, 1], [], []>} : vector<16x128xbf16>, vector<128x128xbf16>, vector<16x128xf32> -> vector<16x128xf32>
    %20 = vector.extract_strided_slice %19 {offsets = [0, 0], sizes = [16, 8], strides = [1, 1]} : vector<16x128xf32> to vector<16x8xf32>
    %c2 = arith.constant 2 : index
    %c0_14 = arith.constant 0 : index
    %21 = vector.load %arg5[%c2, %c0_14] : memref<3x128xf32, #tpu.memory_space<vmem>>, vector<1x8xf32>
    %22 = vector.broadcast %21 : vector<1x8xf32> to vector<16x8xf32>
    %23 = arith.addf %20, %22 : vector<16x8xf32>
    %24 = math.tanh %23 : vector<16x8xf32>
    %c0_15 = arith.constant 0 : index
    %c0_16 = arith.constant 0 : index
    %25 = vector.load %arg6[%c0_15, %c0_16] : memref<16x8xf32, #tpu.memory_space<vmem>>, vector<16x8xf32>
    tpu.vector_store %arg6[%c0_15, %c0_16], %24 {strides = array<i32>} : memref<16x8xf32, #tpu.memory_space<vmem>>, vector<16x8xf32>,
    return
  }
  func.func @transform_0(%arg0: i32) -> (i32, i32) {
    %c0_i32 = arith.constant 0 : i32
    %c0_i32_0 = arith.constant 0 : i32
    return %arg0, %c0_i32 : i32, i32
  }
  func.func @transform_1(%arg0: i32) -> (i32, i32) {
    %c0_i32 = arith.constant 0 : i32
    %c0_i32_0 = arith.constant 0 : i32
    %c0_i32_1 = arith.constant 0 : i32
    return %c0_i32, %c0_i32_0 : i32, i32
  }
  func.func @transform_2(%arg0: i32) -> (i32, i32) {
    %c0_i32 = arith.constant 0 : i32
    %c0_i32_0 = arith.constant 0 : i32
    %c0_i32_1 = arith.constant 0 : i32
    return %c0_i32, %c0_i32_0 : i32, i32
  }
  func.func @transform_3(%arg0: i32) -> (i32, i32) {
    %c0_i32 = arith.constant 0 : i32
    %c0_i32_0 = arith.constant 0 : i32
    %c0_i32_1 = arith.constant 0 : i32
    return %c0_i32, %c0_i32_0 : i32, i32
  }
  func.func @transform_4(%arg0: i32) -> (i32, i32) {
    %c0_i32 = arith.constant 0 : i32
    %c0_i32_0 = arith.constant 0 : i32
    %c0_i32_1 = arith.constant 0 : i32
    return %c0_i32, %c0_i32_0 : i32, i32
  }
  func.func @transform_5(%arg0: i32) -> (i32, i32) {
    %c0_i32 = arith.constant 0 : i32
    %c0_i32_0 = arith.constant 0 : i32
    return %arg0, %c0_i32 : i32, i32
  }
}

</mosaic_0001>

<llo_original>
// kernel: tpu_custom_call.1
$region0: #{tpu_custom_call.1}
  #allocation0 [shape = 'u32[]', space=smem, size = 0x4, offset = 0x4, fixed_abs, tag = 'smem constant byte address 0x4 - core index']
  #allocation1 [shape = 'u32[144,128]{1,0:T(1,128)}', space=vmem, size = 0x12000, scoped, tag = 'internal scratch']
  %s0 = inlined_call_operand.hbm [shape: f32[16,32], index: 0, kind: input, shape index: {}]
  %s1 = inlined_call_operand.hbm [shape: bf16[32,128], index: 1, kind: input, shape index: {}]
  %s2 = inlined_call_operand.hbm [shape: bf16[128,128], index: 2, kind: input, shape index: {}]
  %s3 = inlined_call_operand.hbm [shape: bf16[128,128], index: 3, kind: input, shape index: {}]
  %s4 = inlined_call_operand.vmem [shape: f32[3,128], index: 4, kind: input, shape index: {}]
  %s5 = inlined_call_operand.vmem [shape: f32[16,8], index: 5, kind: output, shape index: {}]
  %s6 = sld [smem:[#allocation0]]
  $region46: #{tpu_custom_call.1} parent=0
    _
  %s8 = ssub.s32 1, %s6
  %s9 = scalar_select 0, %s8, %s6
  $region1: #{tpu_custom_call.1} parent=0
    #allocation2 [shape = 'u8[8192]{0}', space=vmem, size = 0x2000, scoped, tag = 'input window, operand 0, single buffered']
    #allocation3 [shape = 's32[1]{0}', space=sflag, size = 0x4, scoped, tag = 'scoped memory for tpu_custom_call.1']
    #allocation4 [shape = 'u8[8192]{0}', space=vmem, size = 0x2000, scoped, tag = 'input window, operand 1, single buffered']
    #allocation5 [shape = 's32[1]{0}', space=sflag, size = 0x4, scoped, tag = 'scoped memory for tpu_custom_call.1']
    #allocation6 [shape = 'u8[32768]{0}', space=vmem, size = 0x8000, scoped, tag = 'input window, operand 2, single buffered']
    #allocation7 [shape = 'u8[32768]{0}', space=vmem, size = 0x8000, scoped, tag = 'input window, operand 3, single buffered']
    #allocation8 [shape = 's32[1]{0}', space=sflag, size = 0x4, scoped, tag = 'scoped memory for tpu_custom_call.1']
    %10 = vsyncpa [#allocation3], 0
    %11 = vsyncpa [#allocation5], 0
    %12 = vsyncpa [#allocation8], 0
    // Predicated region
    $region2: #{tpu_custom_call.1} parent=1 // pred_check
      _
    $region3: #{tpu_custom_call.1} parent=1 // pred_check_branch
      %14 = sbr.rel (0) target = $region5
    $region4: #{tpu_custom_call.1} parent=1 // pred_region
      %s16 = ssub.s32 256, 256
      %17 = vsyncadd [#allocation3], %s16
      %s18 = sshll.u32 [#allocation2], 4
      %s19 = int_to_ptr.vmem [resolvable:$true] %s18
      %24 = dma.hbm_to_vmem [thread:$0]  %s0, 256, %s19, [#allocation3], 128, 128, 8
    $region5: #{tpu_custom_call.1} parent=1 // pred_fallthru
      _
    // Predicated region
    $region6: #{tpu_custom_call.1} parent=1 // pred_check
      _
    $region7: #{tpu_custom_call.1} parent=1 // pred_check_branch
      %26 = sbr.rel (0) target = $region9
    $region8: #{tpu_custom_call.1} parent=1 // pred_region
      %s28 = ssub.s32 256, 256
      %29 = vsyncadd [#allocation5], %s28
      %s30 = sshll.u32 [#allocation4], 4
      %s31 = int_to_ptr.vmem [resolvable:$true] %s30
      %36 = dma.hbm_to_vmem [thread:$0]  %s1, 256, %s31, [#allocation5], 64, 64, 4
    $region9: #{tpu_custom_call.1} parent=1 // pred_fallthru
      _
    // Predicated region
    $region10: #{tpu_custom_call.1} parent=1 // pred_check
      _
    $region11: #{tpu_custom_call.1} parent=1 // pred_check_branch
      %38 = sbr.rel (0) target = $region13
    $region12: #{tpu_custom_call.1} parent=1 // pred_region
      %s40 = ssub.s32 1024, 1024
      %41 = vsyncadd [#allocation5], %s40
      %s42 = sshll.u32 [#allocation6], 4
      %s43 = int_to_ptr.vmem [resolvable:$true] %s42
      %48 = dma.hbm_to_vmem [thread:$0]  %s2, 1024, %s43, [#allocation5], 64, 64, 4
    $region13: #{tpu_custom_call.1} parent=1 // pred_fallthru
      _
    // Predicated region
    $region14: #{tpu_custom_call.1} parent=1 // pred_check
      _
    $region15: #{tpu_custom_call.1} parent=1 // pred_check_branch
      %50 = sbr.rel (0) target = $region17
    $region16: #{tpu_custom_call.1} parent=1 // pred_region
      %s52 = ssub.s32 1024, 1024
      %53 = vsyncadd [#allocation8], %s52
      %s54 = sshll.u32 [#allocation7], 4
      %s55 = int_to_ptr.vmem [resolvable:$true] %s54
      %60 = dma.hbm_to_vmem [thread:$0]  %s3, 1024, %s55, [#allocation8], 64, 64, 4
    $region17: #{tpu_custom_call.1} parent=1 // pred_fallthru
      _
    // Predicated region
    $region18: #{tpu_custom_call.1} parent=1 // pred_check
      _
    $region19: #{tpu_custom_call.1} parent=1 // pred_check_branch
      %62 = sbr.rel (0) target = $region21
    $region20: #{tpu_custom_call.1} parent=1 // pred_region
      _
    $region21: #{tpu_custom_call.1} parent=1 // pred_fallthru
      _
    // Predicated region
    $region22: #{tpu_custom_call.1} parent=1 // pred_check
      _
    $region23: #{tpu_custom_call.1} parent=1 // pred_check_branch
      %64 = sbr.rel (0) target = $region25
    $region24: #{tpu_custom_call.1} parent=1 // pred_region
      %65 = dma.done [#allocation3], 256
    $region25: #{tpu_custom_call.1} parent=1 // pred_fallthru
      _
    // Predicated region
    $region26: #{tpu_custom_call.1} parent=1 // pred_check
      _
    $region27: #{tpu_custom_call.1} parent=1 // pred_check_branch
      %67 = sbr.rel (0) target = $region29
    $region28: #{tpu_custom_call.1} parent=1 // pred_region
      %68 = dma.done [#allocation5], 256
    $region29: #{tpu_custom_call.1} parent=1 // pred_fallthru
      _
    // Predicated region
    $region30: #{tpu_custom_call.1} parent=1 // pred_check
      _
    $region31: #{tpu_custom_call.1} parent=1 // pred_check_branch
      %70 = sbr.rel (0) target = $region33
    $region32: #{tpu_custom_call.1} parent=1 // pred_region
      %71 = dma.done [#allocation5], 1024
    $region33: #{tpu_custom_call.1} parent=1 // pred_fallthru
      _
    // Predicated region
    $region34: #{tpu_custom_call.1} parent=1 // pred_check
      _
    $region35: #{tpu_custom_call.1} parent=1 // pred_check_branch
      %73 = sbr.rel (0) target = $region37
    $region36: #{tpu_custom_call.1} parent=1 // pred_region
      %74 = dma.done [#allocation8], 1024
    $region37: #{tpu_custom_call.1} parent=1 // pred_fallthru
      _
    %v76 = vld [vmem:[#allocation2] sm:$0xff]
    %v77 = vld [vmem:[#allocation2 + $0x8] sm:$0xff]
    %v78 = vpack.c.bf16 %v77, %v76
    %v79 = vld [vmem:[#allocation4] sm:$0xf]
    %v80 = vld [vmem:[#allocation4 + $0x4] sm:$0xf]
    %v81 = vld [vmem:[#allocation4 + $0x8] sm:$0xf]
    %v82 = vld [vmem:[#allocation4 + $0xc] sm:$0xf]
    %v83 = vld [vmem:[%s4] sm:$0x1]
    %v84 = vlaneseq
    %v85 = vshrl.u32 %v84, 7
    %v86 = vsub.s32 0, %v85
    %v87 = vrot.slane %v83, %v86
    %v92 = vunpack.c.l.b16 %v79
    %v93 = vunpack.c.l.b16 %v80
    %v94 = vunpack.c.l.b16 %v81
    %v95 = vunpack.c.l.b16 %v82
    %v96 = vpack.c.b16 %v93, %v92
    %v97 = vpack.c.b16 %v95, %v94
    %vm100 = vcmask 261120
    %v102 = vsel %vm100, %v78, 0
    %104 = vmatprep.subr.bf16.mxu0 0
    %105 = vmatpush1.bf16.msra.mxu0 0
    %106 = vmatprep.subr.bf16.mxu0 0
    %107 = vmatpush1.bf16.msra.mxu0 0
    %108 = vmatprep.subr.bf16.mxu0 0
    %109 = vmatpush1.bf16.msra.mxu0 0
    %110 = vmatprep.subr.bf16.mxu0 0
    %111 = vmatpush1.bf16.msra.mxu0 0
    %112 = vmatprep.subr.bf16.mxu0 0
    %113 = vmatpush1.bf16.msra.mxu0 0
    %114 = vmatprep.subr.bf16.mxu0 0
    %115 = vmatpush1.bf16.msra.mxu0 0
    %116 = vmatprep.subr.bf16.mxu0 0
    %117 = vmatpush1.bf16.msra.mxu0 %v97
    %118 = vmatprep.subr.bf16.mxu0 0
    %119 = vmatpush1.bf16.msra.mxu0 %v96
    %120 = vmatprep.subr.bf16.mxu0 0
    %121 = vmatpush2.bf16.msra.mxu0 0
    %122 = vmatprep.subr.bf16.mxu0 0
    %123 = vmatpush2.bf16.msra.mxu0 0
    %124 = vmatprep.subr.bf16.mxu0 0
    %125 = vmatpush2.bf16.msra.mxu0 0
    %126 = vmatprep.subr.bf16.mxu0 0
    %127 = vmatpush2.bf16.msra.mxu0 0
    %128 = vmatprep.subr.bf16.mxu0 0
    %129 = vmatpush2.bf16.msra.mxu0 0
    %130 = vmatprep.subr.bf16.mxu0 0
    %131 = vmatpush2.bf16.msra.mxu0 0
    %132 = vmatprep.subr.bf16.mxu0 0
    %133 = vmatpush2.bf16.msra.mxu0 0
    %134 = vmatprep.subr.bf16.mxu0 0
    %135 = vmatpush2.bf16.msra.mxu0 0
    %136 = vmatprep.mubr.bf16.mxu0 0
    %137 = vmatmul.mubr.bf16.gmra.mxu0 %v102
    %v138 = vpop.f32.mrf.mxu0
    %v139 = vadd.f32 %v87, %v138
    %v140 = vpop.f32.mrf.mxu0
    %v141 = vpop.f32.mrf.mxu0
    %v142 = vadd.f32 %v87, %v141
    %v143 = vpop.f32.mrf.mxu0
    %144 = vdwg.mxu0
    %v145 = vmax.f32 %v139, 0.0
    %v146 = vmax.f32 %v142, 0.0
    %v147 = vpack.c.bf16 %v146, %v145
    %v148 = vld [vmem:[#allocation6] sm:$0xf]
    %v149 = vld [vmem:[#allocation6 + $0x4] sm:$0xf]
    %v150 = vld [vmem:[#allocation6 + $0x8] sm:$0xf]
    %v151 = vld [vmem:[#allocation6 + $0xc] sm:$0xf]
    %v152 = vld [vmem:[#allocation6 + $0x10] sm:$0xf]
    %v153 = vld [vmem:[#allocation6 + $0x14] sm:$0xf]
    %v154 = vld [vmem:[#allocation6 + $0x18] sm:$0xf]
    %v155 = vld [vmem:[#allocation6 + $0x1c] sm:$0xf]
    %v156 = vld [vmem:[#allocation6 + $0x20] sm:$0xf]
    %v157 = vld [vmem:[#allocation6 + $0x24] sm:$0xf]
    %v158 = vld [vmem:[#allocation6 + $0x28] sm:$0xf]
    %v159 = vld [vmem:[#allocation6 + $0x2c] sm:$0xf]
    %v160 = vld [vmem:[#allocation6 + $0x30] sm:$0xf]
    %v161 = vld [vmem:[#allocation6 + $0x34] sm:$0xf]
    %v162 = vld [vmem:[#allocation6 + $0x38] sm:$0xf]
    %v163 = vld [vmem:[#allocation6 + $0x3c] sm:$0xf]
    %v164 = vld [vmem:[%s4 + $0x1] sm:$0x1]
    %v165 = vlaneseq
    %v166 = vshrl.u32 %v165, 7
    %v167 = vsub.s32 0, %v166
    %v168 = vrot.slane %v164, %v167
    %v185 = vunpack.c.l.b16 %v148
    %v186 = vunpack.c.l.b16 %v149
    %v187 = vunpack.c.l.b16 %v150
    %v188 = vunpack.c.l.b16 %v151
    %v189 = vunpack.c.l.b16 %v152
    %v190 = vunpack.c.l.b16 %v153
    %v191 = vunpack.c.l.b16 %v154
    %v192 = vunpack.c.l.b16 %v155
    %v193 = vunpack.c.l.b16 %v156
    %v194 = vunpack.c.l.b16 %v157
    %v195 = vunpack.c.l.b16 %v158
    %v196 = vunpack.c.l.b16 %v159
    %v197 = vunpack.c.l.b16 %v160
    %v198 = vunpack.c.l.b16 %v161
    %v199 = vunpack.c.l.b16 %v162
    %v200 = vunpack.c.l.b16 %v163
    %v201 = vpack.c.b16 %v186, %v185
    %v202 = vpack.c.b16 %v188, %v187
    %v203 = vpack.c.b16 %v190, %v189
    %v204 = vpack.c.b16 %v192, %v191
    %v205 = vpack.c.b16 %v194, %v193
    %v206 = vpack.c.b16 %v196, %v195
    %v207 = vpack.c.b16 %v198, %v197
    %v208 = vpack.c.b16 %v200, %v199
    %217 = vmatprep.subr.bf16.mxu0 0
    %218 = vmatpush1.bf16.msra.mxu0 %v208
    %219 = vmatprep.subr.bf16.mxu0 0
    %220 = vmatpush1.bf16.msra.mxu0 %v207
    %221 = vmatprep.subr.bf16.mxu0 0
    %222 = vmatpush1.bf16.msra.mxu0 %v206
    %223 = vmatprep.subr.bf16.mxu0 0
    %224 = vmatpush1.bf16.msra.mxu0 %v205
    %225 = vmatprep.subr.bf16.mxu0 0
    %226 = vmatpush1.bf16.msra.mxu0 %v204
    %227 = vmatprep.subr.bf16.mxu0 0
    %228 = vmatpush1.bf16.msra.mxu0 %v203
    %229 = vmatprep.subr.bf16.mxu0 0
    %230 = vmatpush1.bf16.msra.mxu0 %v202
    %231 = vmatprep.subr.bf16.mxu0 0
    %232 = vmatpush1.bf16.msra.mxu0 %v201
    %233 = vmatprep.subr.bf16.mxu0 0
    %234 = vmatpush2.bf16.msra.mxu0 0
    %235 = vmatprep.subr.bf16.mxu0 0
    %236 = vmatpush2.bf16.msra.mxu0 0
    %237 = vmatprep.subr.bf16.mxu0 0
    %238 = vmatpush2.bf16.msra.mxu0 0
    %239 = vmatprep.subr.bf16.mxu0 0
    %240 = vmatpush2.bf16.msra.mxu0 0
    %241 = vmatprep.subr.bf16.mxu0 0
    %242 = vmatpush2.bf16.msra.mxu0 0
    %243 = vmatprep.subr.bf16.mxu0 0
    %244 = vmatpush2.bf16.msra.mxu0 0
    %245 = vmatprep.subr.bf16.mxu0 0
    %246 = vmatpush2.bf16.msra.mxu0 0
    %247 = vmatprep.subr.bf16.mxu0 0
    %248 = vmatpush2.bf16.msra.mxu0 0
    %249 = vmatprep.mubr.bf16.mxu0 0
    %250 = vmatmul.mubr.bf16.gmra.mxu0 %v147
    %v251 = vpop.f32.mrf.mxu0
    %v252 = vadd.f32 %v168, %v251
    %v253 = vpop.f32.mrf.mxu0
    %v254 = vpop.f32.mrf.mxu0
    %v255 = vadd.f32 %v168, %v254
    %v256 = vpop.f32.mrf.mxu0
    %257 = vdwg.mxu0
    %v258 = vmax.f32 %v252, 0.0
    %v259 = vmax.f32 %v255, 0.0
    %v260 = vpack.c.bf16 %v259, %v258
    %v261 = vld [vmem:[#allocation7] sm:$0xf]
    %v262 = vld [vmem:[#allocation7 + $0x4] sm:$0xf]
    %v263 = vld [vmem:[#allocation7 + $0x8] sm:$0xf]
    %v264 = vld [vmem:[#allocation7 + $0xc] sm:$0xf]
    %v265 = vld [vmem:[#allocation7 + $0x10] sm:$0xf]
    %v266 = vld [vmem:[#allocation7 + $0x14] sm:$0xf]
    %v267 = vld [vmem:[#allocation7 + $0x18] sm:$0xf]
    %v268 = vld [vmem:[#allocation7 + $0x1c] sm:$0xf]
    %v269 = vld [vmem:[#allocation7 + $0x20] sm:$0xf]
    %v270 = vld [vmem:[#allocation7 + $0x24] sm:$0xf]
    %v271 = vld [vmem:[#allocation7 + $0x28] sm:$0xf]
    %v272 = vld [vmem:[#allocation7 + $0x2c] sm:$0xf]
    %v273 = vld [vmem:[#allocation7 + $0x30] sm:$0xf]
    %v274 = vld [vmem:[#allocation7 + $0x34] sm:$0xf]
    %v275 = vld [vmem:[#allocation7 + $0x38] sm:$0xf]
    %v276 = vld [vmem:[#allocation7 + $0x3c] sm:$0xf]
    %v293 = vunpack.c.l.b16 %v261
    %v294 = vunpack.c.l.b16 %v262
    %v295 = vunpack.c.l.b16 %v263
    %v296 = vunpack.c.l.b16 %v264
    %v297 = vunpack.c.l.b16 %v265
    %v298 = vunpack.c.l.b16 %v266
    %v299 = vunpack.c.l.b16 %v267
    %v300 = vunpack.c.l.b16 %v268
    %v301 = vunpack.c.l.b16 %v269
    %v302 = vunpack.c.l.b16 %v270
    %v303 = vunpack.c.l.b16 %v271
    %v304 = vunpack.c.l.b16 %v272
    %v305 = vunpack.c.l.b16 %v273
    %v306 = vunpack.c.l.b16 %v274
    %v307 = vunpack.c.l.b16 %v275
    %v308 = vunpack.c.l.b16 %v276
    %v309 = vpack.c.b16 %v294, %v293
    %v310 = vpack.c.b16 %v296, %v295
    %v311 = vpack.c.b16 %v298, %v297
    %v312 = vpack.c.b16 %v300, %v299
    %v313 = vpack.c.b16 %v302, %v301
    %v314 = vpack.c.b16 %v304, %v303
    %v315 = vpack.c.b16 %v306, %v305
    %v316 = vpack.c.b16 %v308, %v307
    %325 = vmatprep.subr.bf16.mxu0 0
    %326 = vmatpush1.bf16.msra.mxu0 %v316
    %327 = vmatprep.subr.bf16.mxu0 0
    %328 = vmatpush1.bf16.msra.mxu0 %v315
    %329 = vmatprep.subr.bf16.mxu0 0
    %330 = vmatpush1.bf16.msra.mxu0 %v314
    %331 = vmatprep.subr.bf16.mxu0 0
    %332 = vmatpush1.bf16.msra.mxu0 %v313
    %333 = vmatprep.subr.bf16.mxu0 0
    %334 = vmatpush1.bf16.msra.mxu0 %v312
    %335 = vmatprep.subr.bf16.mxu0 0
    %336 = vmatpush1.bf16.msra.mxu0 %v311
    %337 = vmatprep.subr.bf16.mxu0 0
    %338 = vmatpush1.bf16.msra.mxu0 %v310
    %339 = vmatprep.subr.bf16.mxu0 0
    %340 = vmatpush1.bf16.msra.mxu0 %v309
    %341 = vmatprep.subr.bf16.mxu0 0
    %342 = vmatpush2.bf16.msra.mxu0 0
    %343 = vmatprep.subr.bf16.mxu0 0
    %344 = vmatpush2.bf16.msra.mxu0 0
    %345 = vmatprep.subr.bf16.mxu0 0
    %346 = vmatpush2.bf16.msra.mxu0 0
    %347 = vmatprep.subr.bf16.mxu0 0
    %348 = vmatpush2.bf16.msra.mxu0 0
    %349 = vmatprep.subr.bf16.mxu0 0
    %350 = vmatpush2.bf16.msra.mxu0 0
    %351 = vmatprep.subr.bf16.mxu0 0
    %352 = vmatpush2.bf16.msra.mxu0 0
    %353 = vmatprep.subr.bf16.mxu0 0
    %354 = vmatpush2.bf16.msra.mxu0 0
    %355 = vmatprep.subr.bf16.mxu0 0
    %356 = vmatpush2.bf16.msra.mxu0 0
    %357 = vmatprep.mubr.bf16.mxu0 0
    %358 = vmatmul.mubr.bf16.gmra.mxu0 %v260
    %v359 = vpop.f32.mrf.mxu0
    %v360 = vadd.f32 0.0, %v359
    %v361 = vpop.f32.mrf.mxu0
    %v362 = vpop.f32.mrf.mxu0
    %v363 = vadd.f32 0.0, %v362
    %v364 = vpop.f32.mrf.mxu0
    %365 = vdwg.mxu0
    %v366 = vld [vmem:[%s4 + $0x2] sm:$0x1]
    %v367 = vlaneseq
    %v368 = vshrl.u32 %v367, 7
    %v369 = vsub.s32 0, %v368
    %v370 = vrot.slane %v366, %v369
    %v371 = vadd.f32 %v360, %v370
    %v372 = vadd.f32 %v363, %v370
    %v373 = vtanh.pop %v371
    %v374 = vtanh.pop %v372
    %vm375 = vcmask 64512
    %376 = vst.msk [vmem:[%s5] sm:$0xff] %vm375, %v373
    %377 = vst.msk [vmem:[%s5 + $0x8] sm:$0xff] %vm375, %v374
    // Predicated region
    $region38: #{tpu_custom_call.1} parent=1 // pred_check
      _
    $region39: #{tpu_custom_call.1} parent=1 // pred_check_branch
      %379 = sbr.rel (0) target = $region41
    $region40: #{tpu_custom_call.1} parent=1 // pred_region
      _
    $region41: #{tpu_custom_call.1} parent=1 // pred_fallthru
      _
    // Predicated region
    $region42: #{tpu_custom_call.1} parent=1 // pred_check
      _
    $region43: #{tpu_custom_call.1} parent=1 // pred_check_branch
      %381 = sbr.rel (0) target = $region45
    $region44: #{tpu_custom_call.1} parent=1 // pred_region
      _
    $region45: #{tpu_custom_call.1} parent=1 // pred_fallthru
      _
    %382 = vsyncpa [#allocation3], 1
    %383 = vsyncpa [#allocation5], 1
    %384 = vsyncpa [#allocation8], 1

</llo_original>
